<compile_context>
chip_gen: v7x
topology: tpu7x:2x2x1
jax: 0.10.0
libtpu: 0.0.40
codegen_flags: <defaults>
</compile_context>

<pallas_src>
import jax
import jax.numpy as jnp
from jax.experimental import pallas as pl
from jax.experimental.pallas import tpu as pltpu

LANE = 128        # TPU vreg lane width
SUBLANE = 8       # TPU vreg sublane count
_MAX_TILE_B = 1024  # rows per grid step for very large batches (sweepable)


def _round_up(x, m):
    return (x + m - 1) // m * m


def _pick_tile_b(B):
    """Batch-tile size: exact single tile for small B, >=2 tiles for mid B
    (so both v7x TensorCores work), capped tiles for huge B."""
    if B <= 256:
        return B                                  # one exact tile, no padding
    if B <= 2 * _MAX_TILE_B:
        return _round_up(pl.cdiv(B, 2), SUBLANE)  # grid >= 2 for v7x core split
    return _MAX_TILE_B


def actor_kernel(x_ref, w1_ref, w2_ref, w3_ref, b_ref, o_ref):
    """One batch tile: 3x (matmul + bias) with ReLU / ReLU / Tanh.

    x_ref : (TILE_B, state_dim) f32      w1_ref: (state_dim, H) bf16
    w2_ref: (H, H) bf16                  w3_ref: (H, H) bf16 (cols >= A are 0)
    b_ref : (3, H) f32                   o_ref : (TILE_B, A) f32
    """
    A = o_ref.shape[-1]
    x = x_ref[...].astype(jnp.bfloat16)
    b = b_ref[...]                                           # (3, H) f32

    # layer 1: Linear + ReLU   (bf16 MXU inputs, f32 accumulate)
    h = jnp.dot(x, w1_ref[...], preferred_element_type=jnp.float32) + b[0:1, :]
    h = jnp.maximum(h, 0.0).astype(jnp.bfloat16)
    # layer 2: Linear + ReLU
    h = jnp.dot(h, w2_ref[...], preferred_element_type=jnp.float32) + b[1:2, :]
    h = jnp.maximum(h, 0.0).astype(jnp.bfloat16)
    # layer 3: Linear + Tanh, only the real act_dim columns are finished/stored
    y = jnp.dot(h, w3_ref[...], preferred_element_type=jnp.float32)
    o_ref[...] = jnp.tanh(y[:, :A] + b[2:3, :A]).astype(o_ref.dtype)


def actor_forward(state, params):
    """state: (B, state_dim) float. Returns (B, act_dim) f32 actions."""
    w1, w2, w3, b = params["w1"], params["w2"], params["w3"], params["b"]
    B, sd = state.shape
    H = w2.shape[0]
    A = params["act_dim"]
    assert sd == params["state_dim"], (sd, params["state_dim"])

    TILE_B = _pick_tile_b(B)
    grid = (pl.cdiv(B, TILE_B),)

    cost = pl.CostEstimate(
        flops=2 * B * (sd * H + H * H + H * H),
        transcendentals=B * A,
        bytes_accessed=(4 * B * sd                      # input (f32)
                        + 2 * (sd * H + 2 * H * H)      # bf16 weights
                        + 4 * 3 * H                     # biases
                        + 4 * B * A),                   # output (f32)
    )

    out = pl.pallas_call(
        actor_kernel,
        out_shape=jax.ShapeDtypeStruct((B, A), jnp.float32),
        grid=grid,
        in_specs=[
            pl.BlockSpec((TILE_B, sd), lambda i: (i, 0)),   # x: tiled over batch
            pl.BlockSpec((sd, H), lambda i: (0, 0)),        # w1: VMEM resident
            pl.BlockSpec((H, H), lambda i: (0, 0)),         # w2: VMEM resident
            pl.BlockSpec((H, H), lambda i: (0, 0)),         # w3: VMEM resident
            pl.BlockSpec((3, H), lambda i: (0, 0)),         # biases: resident
        ],
        out_specs=pl.BlockSpec((TILE_B, A), lambda i: (i, 0)),   # narrow writeback
        compiler_params=pltpu.CompilerParams(
            dimension_semantics=("parallel",),    # batch tiles split across TCs (v7x)
        ),
        cost_estimate=cost,
    )(state.astype(jnp.float32), w1, w2, w3, b)

    return out


def init_actor_params(key, state_dim=12, act_dim=2, hidden_size=(100, 100)):
    """Xavier-uniform weights / PyTorch-default biases; hidden dims zero-padded
    to a lane multiple; weights stored in bf16 (MXU input dtype)."""
    h1, h2 = hidden_size
    H = _round_up(max(h1, h2), LANE)          # 100 -> 128
    keys = jax.random.split(key, 6)

    def xavier(k, fan_in, fan_out):
        bound = (6.0 / (fan_in + fan_out)) ** 0.5
        return jax.random.uniform(k, (fan_in, fan_out), jnp.float32, -bound, bound)

    def torch_bias(k, fan_in, fan_out):
        bound = 1.0 / (fan_in ** 0.5)
        return jax.random.uniform(k, (fan_out,), jnp.float32, -bound, bound)

    w1 = jnp.zeros((state_dim, H), jnp.float32).at[:, :h1].set(
        xavier(keys[0], state_dim, h1))
    w2 = jnp.zeros((H, H), jnp.float32).at[:h1, :h2].set(
        xavier(keys[2], h1, h2))
    w3 = jnp.zeros((H, H), jnp.float32).at[:h2, :act_dim].set(
        xavier(keys[4], h2, act_dim))
    b = jnp.zeros((3, H), jnp.float32)
    b = b.at[0, :h1].set(torch_bias(keys[1], state_dim, h1))
    b = b.at[1, :h2].set(torch_bias(keys[3], h1, h2))
    b = b.at[2, :act_dim].set(torch_bias(keys[5], h2, act_dim))

    return {
        "w1": w1.astype(jnp.bfloat16),
        "w2": w2.astype(jnp.bfloat16),
        "w3": w3.astype(jnp.bfloat16),
        "b": b,
        "state_dim": state_dim,
        "act_dim": act_dim,
        "hidden_size": (h1, h2),
        "hidden_pad": H,
    }


def actor_reference(state, params):
    """Pure-JAX reference with the same bf16 casts as the kernel."""
    f32 = jnp.float32
    A = params["act_dim"]
    b = params["b"]
    w1 = params["w1"].astype(f32)
    w2 = params["w2"].astype(f32)
    w3 = params["w3"].astype(f32)

    x = state.astype(jnp.bfloat16).astype(f32)
    h = jnp.maximum(jnp.dot(x, w1) + b[0], 0.0)
    h = h.astype(jnp.bfloat16).astype(f32)
    h = jnp.maximum(jnp.dot(h, w2) + b[1], 0.0)
    h = h.astype(jnp.bfloat16).astype(f32)
    y = jnp.dot(h, w3)[:, :A] + b[2, :A]
    return jnp.tanh(y)


if __name__ == "__main__":
    key = jax.random.PRNGKey(0)
    pkey, xkey = jax.random.split(key)

    state_dim, act_dim, hidden = 12, 2, (100, 100)
    batch = 4

    params = init_actor_params(pkey, state_dim, act_dim, hidden)
    state = jax.random.normal(xkey, (batch, state_dim), jnp.float32)

    out = actor_forward(state, params)
    out = jax.block_until_ready(out)

    ref = actor_reference(state, params)
    assert out.shape == (batch, act_dim), out.shape
    assert jnp.allclose(out, ref, atol=1e-4, rtol=1e-4), "mismatch vs reference"

    print("KERNEL_OK")
</pallas_src>

<mosaic_0001>
module attributes {stable_mosaic.version = 11 : i64} {
  func.func @actor_kernel(%arg0: i32, %arg1: memref<4x12xf32, #tpu.memory_space<vmem>>, %arg2: memref<12x128xbf16, #tpu.memory_space<vmem>>, %arg3: memref<128x128xbf16, #tpu.memory_space<vmem>>, %arg4: memref<128x128xbf16, #tpu.memory_space<vmem>>, %arg5: memref<3x128xf32, #tpu.memory_space<vmem>>, %arg6: memref<4x2xf32, #tpu.memory_space<vmem>>) attributes {dimension_semantics = [#tpu.dimension_semantics<parallel>], iteration_bounds = array<i64: 1>, scalar_prefetch = 0 : i64, scratch_operands = 0 : i64, tpu.core_type = #tpu.core_type<tc>, window_params = [{transform_indices = @transform_0, window_bounds = array<i64: 4, 12>}, {pipeline_mode = #tpu.pipeline_mode<synchronous>, transform_indices = @transform_1, window_bounds = array<i64: 12, 128>}, {pipeline_mode = #tpu.pipeline_mode<synchronous>, transform_indices = @transform_2, window_bounds = array<i64: 128, 128>}, {pipeline_mode = #tpu.pipeline_mode<synchronous>, transform_indices = @transform_3, window_bounds = array<i64: 128, 128>}, {pipeline_mode = #tpu.pipeline_mode<synchronous>, transform_indices = @transform_4, window_bounds = array<i64: 3, 128>}, {transform_indices = @transform_5, window_bounds = array<i64: 4, 2>}]} {
    %c0 = arith.constant 0 : index
    %c0_0 = arith.constant 0 : index
    %0 = vector.load %arg1[%c0, %c0_0] : memref<4x12xf32, #tpu.memory_space<vmem>>, vector<4x12xf32>
    %1 = arith.truncf %0 : vector<4x12xf32> to vector<4x12xbf16>
    %c0_1 = arith.constant 0 : index
    %c0_2 = arith.constant 0 : index
    %2 = vector.load %arg5[%c0_1, %c0_2] : memref<3x128xf32, #tpu.memory_space<vmem>>, vector<3x128xf32>
    %c0_3 = arith.constant 0 : index
    %c0_4 = arith.constant 0 : index
    %3 = vector.load %arg2[%c0_3, %c0_4] : memref<12x128xbf16, #tpu.memory_space<vmem>>, vector<12x128xbf16>
    %cst = arith.constant dense<0.000000e+00> : vector<4x128xf32>
    %4 = tpu.matmul %1, %3, %cst {dimension_numbers = #tpu.dot_dimension_numbers<[1], [0], [0], [1], [0, 0, 1, 1], [], []>} : vector<4x12xbf16>, vector<12x128xbf16>, vector<4x128xf32> -> vector<4x128xf32>
    %5 = vector.extract_strided_slice %2 {offsets = [0, 0], sizes = [1, 128], strides = [1, 1]} : vector<3x128xf32> to vector<1x128xf32>
    %6 = vector.broadcast %5 : vector<1x128xf32> to vector<4x128xf32>
    %7 = arith.addf %4, %6 : vector<4x128xf32>
    %cst_5 = arith.constant 0.000000e+00 : f32
    %8 = vector.broadcast %cst_5 : f32 to vector<4x128xf32>
    %9 = arith.maximumf %7, %8 : vector<4x128xf32>
    %10 = arith.truncf %9 : vector<4x128xf32> to vector<4x128xbf16>
    %c0_6 = arith.constant 0 : index
    %c0_7 = arith.constant 0 : index
    %11 = vector.load %arg3[%c0_6, %c0_7] : memref<128x128xbf16, #tpu.memory_space<vmem>>, vector<128x128xbf16>
    %cst_8 = arith.constant dense<0.000000e+00> : vector<4x128xf32>
    %12 = tpu.matmul %10, %11, %cst_8 {dimension_numbers = #tpu.dot_dimension_numbers<[1], [0], [0], [1], [0, 0, 1, 1], [], []>} : vector<4x128xbf16>, vector<128x128xbf16>, vector<4x128xf32> -> vector<4x128xf32>
    %13 = vector.extract_strided_slice %2 {offsets = [1, 0], sizes = [1, 128], strides = [1, 1]} : vector<3x128xf32> to vector<1x128xf32>
    %14 = vector.broadcast %13 : vector<1x128xf32> to vector<4x128xf32>
    %15 = arith.addf %12, %14 : vector<4x128xf32>
    %cst_9 = arith.constant 0.000000e+00 : f32
    %16 = vector.broadcast %cst_9 : f32 to vector<4x128xf32>
    %17 = arith.maximumf %15, %16 : vector<4x128xf32>
    %18 = arith.truncf %17 : vector<4x128xf32> to vector<4x128xbf16>
    %c0_10 = arith.constant 0 : index
    %c0_11 = arith.constant 0 : index
    %19 = vector.load %arg4[%c0_10, %c0_11] : memref<128x128xbf16, #tpu.memory_space<vmem>>, vector<128x128xbf16>
    %cst_12 = arith.constant dense<0.000000e+00> : vector<4x128xf32>
    %20 = tpu.matmul %18, %19, %cst_12 {dimension_numbers = #tpu.dot_dimension_numbers<[1], [0], [0], [1], [0, 0, 1, 1], [], []>} : vector<4x128xbf16>, vector<128x128xbf16>, vector<4x128xf32> -> vector<4x128xf32>
    %21 = vector.extract_strided_slice %20 {offsets = [0, 0], sizes = [4, 2], strides = [1, 1]} : vector<4x128xf32> to vector<4x2xf32>
    %22 = vector.extract_strided_slice %2 {offsets = [2, 0], sizes = [1, 2], strides = [1, 1]} : vector<3x128xf32> to vector<1x2xf32>
    %23 = vector.broadcast %22 : vector<1x2xf32> to vector<4x2xf32>
    %24 = arith.addf %21, %23 : vector<4x2xf32>
    %25 = math.tanh %24 : vector<4x2xf32>
    %c0_13 = arith.constant 0 : index
    %c0_14 = arith.constant 0 : index
    %26 = vector.load %arg6[%c0_13, %c0_14] : memref<4x2xf32, #tpu.memory_space<vmem>>, vector<4x2xf32>
    tpu.vector_store %arg6[%c0_13, %c0_14], %25 {strides = array<i32>} : memref<4x2xf32, #tpu.memory_space<vmem>>, vector<4x2xf32>,
    return
  }
  func.func @transform_0(%arg0: i32) -> (i32, i32) {
    %c0_i32 = arith.constant 0 : i32
    %c0_i32_0 = arith.constant 0 : i32
    return %arg0, %c0_i32 : i32, i32
  }
  func.func @transform_1(%arg0: i32) -> (i32, i32) {
    %c0_i32 = arith.constant 0 : i32
    %c0_i32_0 = arith.constant 0 : i32
    %c0_i32_1 = arith.constant 0 : i32
    return %c0_i32, %c0_i32_0 : i32, i32
  }
  func.func @transform_2(%arg0: i32) -> (i32, i32) {
    %c0_i32 = arith.constant 0 : i32
    %c0_i32_0 = arith.constant 0 : i32
    %c0_i32_1 = arith.constant 0 : i32
    return %c0_i32, %c0_i32_0 : i32, i32
  }
  func.func @transform_3(%arg0: i32) -> (i32, i32) {
    %c0_i32 = arith.constant 0 : i32
    %c0_i32_0 = arith.constant 0 : i32
    %c0_i32_1 = arith.constant 0 : i32
    return %c0_i32, %c0_i32_0 : i32, i32
  }
  func.func @transform_4(%arg0: i32) -> (i32, i32) {
    %c0_i32 = arith.constant 0 : i32
    %c0_i32_0 = arith.constant 0 : i32
    %c0_i32_1 = arith.constant 0 : i32
    return %c0_i32, %c0_i32_0 : i32, i32
  }
  func.func @transform_5(%arg0: i32) -> (i32, i32) {
    %c0_i32 = arith.constant 0 : i32
    %c0_i32_0 = arith.constant 0 : i32
    return %arg0, %c0_i32 : i32, i32
  }
}

</mosaic_0001>

<llo_original>
// kernel: tpu_custom_call.1
$region0: #{tpu_custom_call.1}
  #allocation0 [shape = 'u32[]', space=smem, size = 0x4, offset = 0x4, fixed_abs, tag = 'smem constant byte address 0x4 - core index']
  #allocation1 [shape = 'u32[144,128]{1,0:T(1,128)}', space=vmem, size = 0x12000, scoped, tag = 'internal scratch']
  %s0 = inlined_call_operand.hbm [shape: f32[4,12], index: 0, kind: input, shape index: {}]
  %s1 = inlined_call_operand.hbm [shape: bf16[12,128], index: 1, kind: input, shape index: {}]
  %s2 = inlined_call_operand.hbm [shape: bf16[128,128], index: 2, kind: input, shape index: {}]
  %s3 = inlined_call_operand.hbm [shape: bf16[128,128], index: 3, kind: input, shape index: {}]
  %s4 = inlined_call_operand.vmem [shape: f32[3,128], index: 4, kind: input, shape index: {}]
  %s5 = inlined_call_operand.vmem [shape: f32[4,2], index: 5, kind: output, shape index: {}]
  %s6 = sld [smem:[#allocation0]]
  $region46: #{tpu_custom_call.1} parent=0
    _
  %s8 = ssub.s32 1, %s6
  %s9 = scalar_select 0, %s8, %s6
  $region1: #{tpu_custom_call.1} parent=0
    #allocation2 [shape = 'u8[2048]{0}', space=vmem, size = 0x800, scoped, tag = 'input window, operand 0, single buffered']
    #allocation3 [shape = 's32[1]{0}', space=sflag, size = 0x4, scoped, tag = 'scoped memory for tpu_custom_call.1']
    #allocation4 [shape = 'u8[4096]{0}', space=vmem, size = 0x1000, scoped, tag = 'input window, operand 1, single buffered']
    #allocation5 [shape = 's32[1]{0}', space=sflag, size = 0x4, scoped, tag = 'scoped memory for tpu_custom_call.1']
    #allocation6 [shape = 'u8[32768]{0}', space=vmem, size = 0x8000, scoped, tag = 'input window, operand 2, single buffered']
    #allocation7 [shape = 'u8[32768]{0}', space=vmem, size = 0x8000, scoped, tag = 'input window, operand 3, single buffered']
    #allocation8 [shape = 's32[1]{0}', space=sflag, size = 0x4, scoped, tag = 'scoped memory for tpu_custom_call.1']
    %10 = vsyncpa [#allocation3], 0
    %11 = vsyncpa [#allocation5], 0
    %12 = vsyncpa [#allocation8], 0
    // Predicated region
    $region2: #{tpu_custom_call.1} parent=1 // pred_check
      _
    $region3: #{tpu_custom_call.1} parent=1 // pred_check_branch
      %14 = sbr.rel (0) target = $region5
    $region4: #{tpu_custom_call.1} parent=1 // pred_region
      %s16 = ssub.s32 64, 64
      %17 = vsyncadd [#allocation3], %s16
      %s19 = sshll.u32 [#allocation2], 4
      %s20 = int_to_ptr.vmem [resolvable:$true] %s19
      %22 = dma.hbm_to_vmem [thread:$0]  %s0, 64, %s20, [#allocation3]
    $region5: #{tpu_custom_call.1} parent=1 // pred_fallthru
      _
    // Predicated region
    $region6: #{tpu_custom_call.1} parent=1 // pred_check
      _
    $region7: #{tpu_custom_call.1} parent=1 // pred_check_branch
      %24 = sbr.rel (0) target = $region9
    $region8: #{tpu_custom_call.1} parent=1 // pred_region
      %s26 = ssub.s32 128, 128
      %27 = vsyncadd [#allocation5], %s26
      %s28 = sshll.u32 [#allocation4], 4
      %s29 = int_to_ptr.vmem [resolvable:$true] %s28
      %34 = dma.hbm_to_vmem [thread:$0]  %s1, 128, %s29, [#allocation5], 64, 64, 4
    $region9: #{tpu_custom_call.1} parent=1 // pred_fallthru
      _
    // Predicated region
    $region10: #{tpu_custom_call.1} parent=1 // pred_check
      _
    $region11: #{tpu_custom_call.1} parent=1 // pred_check_branch
      %36 = sbr.rel (0) target = $region13
    $region12: #{tpu_custom_call.1} parent=1 // pred_region
      %s38 = ssub.s32 1024, 1024
      %39 = vsyncadd [#allocation5], %s38
      %s40 = sshll.u32 [#allocation6], 4
      %s41 = int_to_ptr.vmem [resolvable:$true] %s40
      %46 = dma.hbm_to_vmem [thread:$0]  %s2, 1024, %s41, [#allocation5], 64, 64, 4
    $region13: #{tpu_custom_call.1} parent=1 // pred_fallthru
      _
    // Predicated region
    $region14: #{tpu_custom_call.1} parent=1 // pred_check
      _
    $region15: #{tpu_custom_call.1} parent=1 // pred_check_branch
      %48 = sbr.rel (0) target = $region17
    $region16: #{tpu_custom_call.1} parent=1 // pred_region
      %s50 = ssub.s32 1024, 1024
      %51 = vsyncadd [#allocation8], %s50
      %s52 = sshll.u32 [#allocation7], 4
      %s53 = int_to_ptr.vmem [resolvable:$true] %s52
      %58 = dma.hbm_to_vmem [thread:$0]  %s3, 1024, %s53, [#allocation8], 64, 64, 4
    $region17: #{tpu_custom_call.1} parent=1 // pred_fallthru
      _
    // Predicated region
    $region18: #{tpu_custom_call.1} parent=1 // pred_check
      _
    $region19: #{tpu_custom_call.1} parent=1 // pred_check_branch
      %60 = sbr.rel (0) target = $region21
    $region20: #{tpu_custom_call.1} parent=1 // pred_region
      _
    $region21: #{tpu_custom_call.1} parent=1 // pred_fallthru
      _
    // Predicated region
    $region22: #{tpu_custom_call.1} parent=1 // pred_check
      _
    $region23: #{tpu_custom_call.1} parent=1 // pred_check_branch
      %62 = sbr.rel (0) target = $region25
    $region24: #{tpu_custom_call.1} parent=1 // pred_region
      %63 = dma.done [#allocation3], 64
    $region25: #{tpu_custom_call.1} parent=1 // pred_fallthru
      _
    // Predicated region
    $region26: #{tpu_custom_call.1} parent=1 // pred_check
      _
    $region27: #{tpu_custom_call.1} parent=1 // pred_check_branch
      %65 = sbr.rel (0) target = $region29
    $region28: #{tpu_custom_call.1} parent=1 // pred_region
      %66 = dma.done [#allocation5], 128
    $region29: #{tpu_custom_call.1} parent=1 // pred_fallthru
      _
    // Predicated region
    $region30: #{tpu_custom_call.1} parent=1 // pred_check
      _
    $region31: #{tpu_custom_call.1} parent=1 // pred_check_branch
      %68 = sbr.rel (0) target = $region33
    $region32: #{tpu_custom_call.1} parent=1 // pred_region
      %69 = dma.done [#allocation5], 1024
    $region33: #{tpu_custom_call.1} parent=1 // pred_fallthru
      _
    // Predicated region
    $region34: #{tpu_custom_call.1} parent=1 // pred_check
      _
    $region35: #{tpu_custom_call.1} parent=1 // pred_check_branch
      %71 = sbr.rel (0) target = $region37
    $region36: #{tpu_custom_call.1} parent=1 // pred_region
      %72 = dma.done [#allocation8], 1024
    $region37: #{tpu_custom_call.1} parent=1 // pred_fallthru
      _
    %v74 = vld [vmem:[#allocation2] sm:$0xf]
    %v75 = vpack.c.bf16 %v74, %v74
    %v76 = vld [vmem:[%s4] sm:$0x7]
    %v77 = vld [vmem:[#allocation4] sm:$0xf]
    %v78 = vld [vmem:[#allocation4 + $0x4] sm:$0x3]
    %v79 = vlaneseq
    %v80 = vshrl.u32 %v79, 7
    %v81 = vsub.s32 0, %v80
    %v82 = vrot.slane %v76, %v81
    %v85 = vunpack.c.l.b16 %v77
    %v86 = vunpack.c.l.b16 %v78
    %v87 = vpack.c.b16 %v86, %v85
    %vm88 = vcmask 97280
    %v90 = vsel %vm88, %v75, 0
    %vm92 = vcmask 1045504
    %v94 = vsel %vm92, %v87, 0
    %96 = vmatprep.subr.bf16.mxu0 0
    %97 = vmatpush1.bf16.msra.mxu0 %v94
    %98 = vmatprep.subr.bf16.mxu0 0
    %99 = vmatpush1.bf16.msra.mxu0 0
    %100 = vmatprep.subr.bf16.mxu0 0
    %101 = vmatpush1.bf16.msra.mxu0 0
    %102 = vmatprep.subr.bf16.mxu0 0
    %103 = vmatpush1.bf16.msra.mxu0 0
    %104 = vmatprep.subr.bf16.mxu0 0
    %105 = vmatpush1.bf16.msra.mxu0 0
    %106 = vmatprep.subr.bf16.mxu0 0
    %107 = vmatpush1.bf16.msra.mxu0 0
    %108 = vmatprep.subr.bf16.mxu0 0
    %109 = vmatpush1.bf16.msra.mxu0 0
    %110 = vmatprep.subr.bf16.mxu0 0
    %111 = vmatpush1.bf16.msra.mxu0 0
    %112 = vmatprep.subr.bf16.mxu0 0
    %113 = vmatpush1.bf16.msra.mxu0 0
    %114 = vmatprep.subr.bf16.mxu0 0
    %115 = vmatpush1.bf16.msra.mxu0 0
    %116 = vmatprep.subr.bf16.mxu0 0
    %117 = vmatpush1.bf16.msra.mxu0 0
    %118 = vmatprep.subr.bf16.mxu0 0
    %119 = vmatpush1.bf16.msra.mxu0 0
    %120 = vmatprep.subr.bf16.mxu0 0
    %121 = vmatpush1.bf16.msra.mxu0 0
    %122 = vmatprep.subr.bf16.mxu0 0
    %123 = vmatpush1.bf16.msra.mxu0 0
    %124 = vmatprep.subr.bf16.mxu0 0
    %125 = vmatpush1.bf16.msra.mxu0 0
    %126 = vmatprep.subr.bf16.mxu0 0
    %127 = vmatpush1.bf16.msra.mxu0 0
    %128 = vmatprep.mubr.bf16.mxu0 0
    %129 = vmatmul.mubr.bf16.gmra.mrb[0].mxu0 %v90
    %v130 = vpop.f32.mrb[0].mxu0
    %v131 = vadd.f32 %v82, %v130
    %v132 = vpop.f32.mrb[0].mxu0
    %v133 = vpop.f32.mrb[0].mxu0
    %v134 = vpop.f32.mrb[0].mxu0
    %135 = vdwg.mxu0
    %v136 = vmax.f32 %v131, 0.0
    %v137 = vpack.c.bf16 %v136, %v136
    %v138 = vld [vmem:[#allocation6] sm:$0xf]
    %v139 = vld [vmem:[#allocation6 + $0x4] sm:$0xf]
    %v140 = vld [vmem:[#allocation6 + $0x8] sm:$0xf]
    %v141 = vld [vmem:[#allocation6 + $0xc] sm:$0xf]
    %v142 = vld [vmem:[#allocation6 + $0x10] sm:$0xf]
    %v143 = vld [vmem:[#allocation6 + $0x14] sm:$0xf]
    %v144 = vld [vmem:[#allocation6 + $0x18] sm:$0xf]
    %v145 = vld [vmem:[#allocation6 + $0x1c] sm:$0xf]
    %v146 = vld [vmem:[#allocation6 + $0x20] sm:$0xf]
    %v147 = vld [vmem:[#allocation6 + $0x24] sm:$0xf]
    %v148 = vld [vmem:[#allocation6 + $0x28] sm:$0xf]
    %v149 = vld [vmem:[#allocation6 + $0x2c] sm:$0xf]
    %v150 = vld [vmem:[#allocation6 + $0x30] sm:$0xf]
    %v151 = vld [vmem:[#allocation6 + $0x34] sm:$0xf]
    %v152 = vld [vmem:[#allocation6 + $0x38] sm:$0xf]
    %v153 = vld [vmem:[#allocation6 + $0x3c] sm:$0xf]
    %v154 = vlaneseq
    %v155 = vshrl.u32 %v154, 7
    %v156 = vsub.s32 1, %v155
    %v157 = vrot.slane %v76, %v156
    %v174 = vunpack.c.l.b16 %v138
    %v175 = vunpack.c.l.b16 %v139
    %v176 = vunpack.c.l.b16 %v140
    %v177 = vunpack.c.l.b16 %v141
    %v178 = vunpack.c.l.b16 %v142
    %v179 = vunpack.c.l.b16 %v143
    %v180 = vunpack.c.l.b16 %v144
    %v181 = vunpack.c.l.b16 %v145
    %v182 = vunpack.c.l.b16 %v146
    %v183 = vunpack.c.l.b16 %v147
    %v184 = vunpack.c.l.b16 %v148
    %v185 = vunpack.c.l.b16 %v149
    %v186 = vunpack.c.l.b16 %v150
    %v187 = vunpack.c.l.b16 %v151
    %v188 = vunpack.c.l.b16 %v152
    %v189 = vunpack.c.l.b16 %v153
    %v190 = vpack.c.b16 %v175, %v174
    %v191 = vpack.c.b16 %v177, %v176
    %v192 = vpack.c.b16 %v179, %v178
    %v193 = vpack.c.b16 %v181, %v180
    %v194 = vpack.c.b16 %v183, %v182
    %v195 = vpack.c.b16 %v185, %v184
    %v196 = vpack.c.b16 %v187, %v186
    %v197 = vpack.c.b16 %v189, %v188
    %206 = vmatprep.subr.bf16.mxu0 0
    %207 = vmatpush1.bf16.msra.mxu0 %v190
    %208 = vmatprep.subr.bf16.mxu0 0
    %209 = vmatpush1.bf16.msra.mxu0 %v191
    %210 = vmatprep.subr.bf16.mxu0 0
    %211 = vmatpush1.bf16.msra.mxu0 %v192
    %212 = vmatprep.subr.bf16.mxu0 0
    %213 = vmatpush1.bf16.msra.mxu0 %v193
    %214 = vmatprep.subr.bf16.mxu0 0
    %215 = vmatpush1.bf16.msra.mxu0 %v194
    %216 = vmatprep.subr.bf16.mxu0 0
    %217 = vmatpush1.bf16.msra.mxu0 %v195
    %218 = vmatprep.subr.bf16.mxu0 0
    %219 = vmatpush1.bf16.msra.mxu0 %v196
    %220 = vmatprep.subr.bf16.mxu0 0
    %221 = vmatpush1.bf16.msra.mxu0 %v197
    %222 = vmatprep.subr.bf16.mxu0 0
    %223 = vmatpush1.bf16.msra.mxu0 0
    %224 = vmatprep.subr.bf16.mxu0 0
    %225 = vmatpush1.bf16.msra.mxu0 0
    %226 = vmatprep.subr.bf16.mxu0 0
    %227 = vmatpush1.bf16.msra.mxu0 0
    %228 = vmatprep.subr.bf16.mxu0 0
    %229 = vmatpush1.bf16.msra.mxu0 0
    %230 = vmatprep.subr.bf16.mxu0 0
    %231 = vmatpush1.bf16.msra.mxu0 0
    %232 = vmatprep.subr.bf16.mxu0 0
    %233 = vmatpush1.bf16.msra.mxu0 0
    %234 = vmatprep.subr.bf16.mxu0 0
    %235 = vmatpush1.bf16.msra.mxu0 0
    %236 = vmatprep.subr.bf16.mxu0 0
    %237 = vmatpush1.bf16.msra.mxu0 0
    %238 = vmatprep.mubr.bf16.mxu0 0
    %239 = vmatmul.mubr.bf16.gmra.mrb[0].mxu0 %v137
    %v240 = vpop.f32.mrb[0].mxu0
    %v241 = vadd.f32 %v157, %v240
    %v242 = vpop.f32.mrb[0].mxu0
    %v243 = vpop.f32.mrb[0].mxu0
    %v244 = vpop.f32.mrb[0].mxu0
    %245 = vdwg.mxu0
    %v246 = vmax.f32 %v241, 0.0
    %v247 = vpack.c.bf16 %v246, %v246
    %v248 = vld [vmem:[#allocation7] sm:$0xf]
    %v249 = vld [vmem:[#allocation7 + $0x4] sm:$0xf]
    %v250 = vld [vmem:[#allocation7 + $0x8] sm:$0xf]
    %v251 = vld [vmem:[#allocation7 + $0xc] sm:$0xf]
    %v252 = vld [vmem:[#allocation7 + $0x10] sm:$0xf]
    %v253 = vld [vmem:[#allocation7 + $0x14] sm:$0xf]
    %v254 = vld [vmem:[#allocation7 + $0x18] sm:$0xf]
    %v255 = vld [vmem:[#allocation7 + $0x1c] sm:$0xf]
    %v256 = vld [vmem:[#allocation7 + $0x20] sm:$0xf]
    %v257 = vld [vmem:[#allocation7 + $0x24] sm:$0xf]
    %v258 = vld [vmem:[#allocation7 + $0x28] sm:$0xf]
    %v259 = vld [vmem:[#allocation7 + $0x2c] sm:$0xf]
    %v260 = vld [vmem:[#allocation7 + $0x30] sm:$0xf]
    %v261 = vld [vmem:[#allocation7 + $0x34] sm:$0xf]
    %v262 = vld [vmem:[#allocation7 + $0x38] sm:$0xf]
    %v263 = vld [vmem:[#allocation7 + $0x3c] sm:$0xf]
    %v280 = vunpack.c.l.b16 %v248
    %v281 = vunpack.c.l.b16 %v249
    %v282 = vunpack.c.l.b16 %v250
    %v283 = vunpack.c.l.b16 %v251
    %v284 = vunpack.c.l.b16 %v252
    %v285 = vunpack.c.l.b16 %v253
    %v286 = vunpack.c.l.b16 %v254
    %v287 = vunpack.c.l.b16 %v255
    %v288 = vunpack.c.l.b16 %v256
    %v289 = vunpack.c.l.b16 %v257
    %v290 = vunpack.c.l.b16 %v258
    %v291 = vunpack.c.l.b16 %v259
    %v292 = vunpack.c.l.b16 %v260
    %v293 = vunpack.c.l.b16 %v261
    %v294 = vunpack.c.l.b16 %v262
    %v295 = vunpack.c.l.b16 %v263
    %v296 = vpack.c.b16 %v281, %v280
    %v297 = vpack.c.b16 %v283, %v282
    %v298 = vpack.c.b16 %v285, %v284
    %v299 = vpack.c.b16 %v287, %v286
    %v300 = vpack.c.b16 %v289, %v288
    %v301 = vpack.c.b16 %v291, %v290
    %v302 = vpack.c.b16 %v293, %v292
    %v303 = vpack.c.b16 %v295, %v294
    %312 = vmatprep.subr.bf16.mxu0 0
    %313 = vmatpush1.bf16.msra.mxu0 %v296
    %314 = vmatprep.subr.bf16.mxu0 0
    %315 = vmatpush1.bf16.msra.mxu0 %v297
    %316 = vmatprep.subr.bf16.mxu0 0
    %317 = vmatpush1.bf16.msra.mxu0 %v298
    %318 = vmatprep.subr.bf16.mxu0 0
    %319 = vmatpush1.bf16.msra.mxu0 %v299
    %320 = vmatprep.subr.bf16.mxu0 0
    %321 = vmatpush1.bf16.msra.mxu0 %v300
    %322 = vmatprep.subr.bf16.mxu0 0
    %323 = vmatpush1.bf16.msra.mxu0 %v301
    %324 = vmatprep.subr.bf16.mxu0 0
    %325 = vmatpush1.bf16.msra.mxu0 %v302
    %326 = vmatprep.subr.bf16.mxu0 0
    %327 = vmatpush1.bf16.msra.mxu0 %v303
    %328 = vmatprep.subr.bf16.mxu0 0
    %329 = vmatpush1.bf16.msra.mxu0 0
    %330 = vmatprep.subr.bf16.mxu0 0
    %331 = vmatpush1.bf16.msra.mxu0 0
    %332 = vmatprep.subr.bf16.mxu0 0
    %333 = vmatpush1.bf16.msra.mxu0 0
    %334 = vmatprep.subr.bf16.mxu0 0
    %335 = vmatpush1.bf16.msra.mxu0 0
    %336 = vmatprep.subr.bf16.mxu0 0
    %337 = vmatpush1.bf16.msra.mxu0 0
    %338 = vmatprep.subr.bf16.mxu0 0
    %339 = vmatpush1.bf16.msra.mxu0 0
    %340 = vmatprep.subr.bf16.mxu0 0
    %341 = vmatpush1.bf16.msra.mxu0 0
    %342 = vmatprep.subr.bf16.mxu0 0
    %343 = vmatpush1.bf16.msra.mxu0 0
    %344 = vmatprep.mubr.bf16.mxu0 0
    %345 = vmatmul.mubr.bf16.gmra.mrb[0].mxu0 %v247
    %v346 = vpop.f32.mrb[0].mxu0
    %v347 = vadd.f32 0.0, %v346
    %v348 = vpop.f32.mrb[0].mxu0
    %v349 = vpop.f32.mrb[0].mxu0
    %v350 = vpop.f32.mrb[0].mxu0
    %351 = vdwg.mxu0
    %v352 = vlaneseq
    %v353 = vshrl.u32 %v352, 7
    %v354 = vsub.s32 2, %v353
    %v355 = vrot.slane %v76, %v354
    %v356 = vadd.f32 %v347, %v355
    %v357 = vtanh.pop %v356
    %vm358 = vcmask 11264
    %359 = vst.msk [vmem:[%s5] sm:$0xf] %vm358, %v357
    // Predicated region
    $region38: #{tpu_custom_call.1} parent=1 // pred_check
      _
    $region39: #{tpu_custom_call.1} parent=1 // pred_check_branch
      %361 = sbr.rel (0) target = $region41
    $region40: #{tpu_custom_call.1} parent=1 // pred_region
      _
    $region41: #{tpu_custom_call.1} parent=1 // pred_fallthru
      _
    // Predicated region
    $region42: #{tpu_custom_call.1} parent=1 // pred_check
      _
    $region43: #{tpu_custom_call.1} parent=1 // pred_check_branch
      %363 = sbr.rel (0) target = $region45
    $region44: #{tpu_custom_call.1} parent=1 // pred_region
      _
    $region45: #{tpu_custom_call.1} parent=1 // pred_fallthru
      _
    %364 = vsyncpa [#allocation3], 1
    %365 = vsyncpa [#allocation5], 1
    %366 = vsyncpa [#allocation8], 1

</llo_original>
